<compile_context>
chip_gen: v5e
topology: v5e:2x2
jax: 0.10.0
libtpu: 0.0.40
codegen_flags: <defaults>
</compile_context>

<pallas_src>
import jax
import jax.numpy as jnp
from jax.experimental import pallas as pl
from jax.experimental.pallas import tpu as pltpu


def link_pred_kernel(xiT_ref, xjT_ref, w1a_ref, w1b_ref, b1_ref, w2_ref, b2_ref, o_ref):
    # ---- Layer 1 (channels-major): hT = W1a @ xiT + W1b @ xjT + b1, ReLU.
    # bf16 operands, f32 accumulation. M=K=C, N=tile_n -> lane-dense everywhere.
    hT = (
        jnp.dot(w1a_ref[...], xiT_ref[...], preferred_element_type=jnp.float32)
        + jnp.dot(w1b_ref[...], xjT_ref[...], preferred_element_type=jnp.float32)
        + b1_ref[...]                       # (C, 1) broadcast across lanes
    )
    hT = jnp.maximum(hT, 0.0)

    # ---- Layer 2, transpose-free: (1, C) @ (C, tile_n) -> (1, tile_n) logit row.
    logit = jnp.dot(w2_ref[...], hT, preferred_element_type=jnp.float32) + b2_ref[...]

    # ---- Stable sigmoid: exp of a non-positive argument only, EUP recip.
    e = jnp.exp(-jnp.abs(logit))
    num = jnp.where(logit >= 0, 1.0, e)
    p = num * pl.reciprocal(1.0 + e, approx=True)

    o_ref[...] = p.astype(o_ref.dtype)


def _round_up(x: int, m: int) -> int:
    return ((x + m - 1) // m) * m


def link_predictor(x_i, x_j, w1, b1, w2, b2, *, tile_n=8192):
    """x_i, x_j: (N, C). w1: (C, 2C), b1: (C,), w2: (1, C), b2: (1,). Returns (N, 1)."""
    N, C = x_i.shape
    out_dtype = x_i.dtype

    # Tile: multiple of 128 lanes; capped so N > 128 always yields >= 2 grid
    # steps (both v7x TensorCores get work).
    n_up = _round_up(N, 128)
    tile_cap = _round_up(max(pl.cdiv(n_up, 2), 128), 128)
    tile_n = max(128, min(_round_up(tile_n, 128), tile_cap))
    n_pad = _round_up(N, tile_n)

    # Glue: channels-major bf16 activation streams (C, N_pad).
    x_iT = x_i.T.astype(jnp.bfloat16)
    x_jT = x_j.T.astype(jnp.bfloat16)
    if n_pad != N:
        pad = ((0, 0), (0, n_pad - N))
        x_iT = jnp.pad(x_iT, pad)
        x_jT = jnp.pad(x_jT, pad)

    # Fold the concat: z @ W1.T == W1[:, :C] @ x_i^T + W1[:, C:] @ x_j^T.
    w1a = w1[:, :C].astype(jnp.bfloat16)    # (C, C) acts on x_i^T
    w1b = w1[:, C:].astype(jnp.bfloat16)    # (C, C) acts on x_j^T
    b1_col = b1.reshape(C, 1).astype(jnp.float32)
    w2_row = w2.reshape(1, C).astype(jnp.float32)
    b2_2d = b2.reshape(1, 1).astype(jnp.float32)

    grid = (n_pad // tile_n,)

    out_row = pl.pallas_call(
        link_pred_kernel,
        out_shape=jax.ShapeDtypeStruct((1, n_pad), out_dtype),
        grid_spec=pltpu.PrefetchScalarGridSpec(
            num_scalar_prefetch=0,
            grid=grid,
            in_specs=[
                pl.BlockSpec((C, tile_n), lambda i: (0, i)),   # x_i^T column tile (pipelined)
                pl.BlockSpec((C, tile_n), lambda i: (0, i)),   # x_j^T column tile (pipelined)
                pl.BlockSpec((C, C), lambda i: (0, 0)),        # w1a (resident)
                pl.BlockSpec((C, C), lambda i: (0, 0)),        # w1b (resident)
                pl.BlockSpec((C, 1), lambda i: (0, 0)),        # b1 column
                pl.BlockSpec((1, C), lambda i: (0, 0)),        # w2 row
                pl.BlockSpec((1, 1), lambda i: (0, 0)),        # b2
            ],
            out_specs=pl.BlockSpec((1, tile_n), lambda i: (0, i)),  # lane-dense probs
        ),
        compiler_params=pltpu.CompilerParams(
            dimension_semantics=("parallel",),   # megacore sharding on v7x
        ),
    )(x_iT, x_jT, w1a, w1b, b1_col, w2_row, b2_2d)

    # (1, N_pad) lane-dense slab -> (N, 1) column expected by the module.
    return out_row.reshape(n_pad, 1)[:N]


def link_predictor_ref(x_i, x_j, w1, b1, w2, b2):
    z = jnp.concatenate([x_i, x_j], axis=1)
    h = jnp.maximum(z @ w1.T + b1, 0.0)
    return jax.nn.sigmoid(h @ w2.T + b2)


if __name__ == "__main__":
    C = 32           # in_channels

    key = jax.random.PRNGKey(0)
    k_xi, k_xj, k_w1, k_b1, k_w2, k_b2 = jax.random.split(key, 6)

    # Deterministic parameter init (uniform, roughly matching torch.nn.Linear scale).
    bound1 = 1.0 / jnp.sqrt(2.0 * C)
    w1 = jax.random.uniform(k_w1, (C, 2 * C), minval=-bound1, maxval=bound1, dtype=jnp.float32)
    b1 = jax.random.uniform(k_b1, (C,), minval=-bound1, maxval=bound1, dtype=jnp.float32)
    bound2 = 1.0 / jnp.sqrt(float(C))
    w2 = jax.random.uniform(k_w2, (1, C), minval=-bound2, maxval=bound2, dtype=jnp.float32)
    b2 = jax.random.uniform(k_b2, (1,), minval=-bound2, maxval=bound2, dtype=jnp.float32)

    # bf16 streaming of activations/weights -> relaxed tolerance vs f32 reference.
    TOL = 1e-2

    # Case 1: ragged N, default tile (capped so the grid still has 2 steps).
    N = 300
    x_i = jax.random.normal(k_xi, (N, C), dtype=jnp.float32)
    x_j = jax.random.normal(k_xj, (N, C), dtype=jnp.float32)
    out = jax.block_until_ready(link_predictor(x_i, x_j, w1, b1, w2, b2))
    ref = link_predictor_ref(x_i, x_j, w1, b1, w2, b2)
    assert out.shape == (N, 1)
    assert jnp.allclose(out, ref, atol=TOL, rtol=0.0)

    # Case 2: same inputs, small explicit tile -> multi-step grid + ragged tail.
    out_s = jax.block_until_ready(link_predictor(x_i, x_j, w1, b1, w2, b2, tile_n=128))
    assert out_s.shape == (N, 1)
    assert jnp.allclose(out_s, ref, atol=TOL, rtol=0.0)

    # Case 3: tiny batch, single grid step.
    N2 = 8
    x_i2 = jax.random.normal(k_xi, (N2, C), dtype=jnp.float32)
    x_j2 = jax.random.normal(k_xj, (N2, C), dtype=jnp.float32)
    out2 = jax.block_until_ready(link_predictor(x_i2, x_j2, w1, b1, w2, b2))
    ref2 = link_predictor_ref(x_i2, x_j2, w1, b1, w2, b2)
    assert out2.shape == (N2, 1)
    assert jnp.allclose(out2, ref2, atol=TOL, rtol=0.0)

    print("KERNEL_OK")
</pallas_src>

<mosaic_0001>
module attributes {stable_mosaic.version = 11 : i64} {
  func.func @link_pred_kernel(%arg0: i32, %arg1: memref<32x256xbf16, #tpu.memory_space<vmem>>, %arg2: memref<32x256xbf16, #tpu.memory_space<vmem>>, %arg3: memref<32x32xbf16, #tpu.memory_space<vmem>>, %arg4: memref<32x32xbf16, #tpu.memory_space<vmem>>, %arg5: memref<32x1xf32, #tpu.memory_space<vmem>>, %arg6: memref<1x32xf32, #tpu.memory_space<vmem>>, %arg7: memref<1x1xf32, #tpu.memory_space<vmem>>, %arg8: memref<1x256xf32, #tpu.memory_space<vmem>>) attributes {dimension_semantics = [#tpu.dimension_semantics<parallel>], iteration_bounds = array<i64: 2>, scalar_prefetch = 0 : i64, scratch_operands = 0 : i64, tpu.core_type = #tpu.core_type<tc>, window_params = [{transform_indices = @transform_0, window_bounds = array<i64: 32, 256>}, {transform_indices = @transform_1, window_bounds = array<i64: 32, 256>}, {pipeline_mode = #tpu.pipeline_mode<synchronous>, transform_indices = @transform_2, window_bounds = array<i64: 32, 32>}, {pipeline_mode = #tpu.pipeline_mode<synchronous>, transform_indices = @transform_3, window_bounds = array<i64: 32, 32>}, {pipeline_mode = #tpu.pipeline_mode<synchronous>, transform_indices = @transform_4, window_bounds = array<i64: 32, 1>}, {pipeline_mode = #tpu.pipeline_mode<synchronous>, transform_indices = @transform_5, window_bounds = array<i64: 1, 32>}, {pipeline_mode = #tpu.pipeline_mode<synchronous>, transform_indices = @transform_6, window_bounds = array<i64: 1, 1>}, {transform_indices = @transform_7, window_bounds = array<i64: 1, 256>}]} {
    %c0 = arith.constant 0 : index
    %c0_0 = arith.constant 0 : index
    %0 = vector.load %arg3[%c0, %c0_0] : memref<32x32xbf16, #tpu.memory_space<vmem>>, vector<32x32xbf16>
    %c0_1 = arith.constant 0 : index
    %c0_2 = arith.constant 0 : index
    %1 = vector.load %arg1[%c0_1, %c0_2] : memref<32x256xbf16, #tpu.memory_space<vmem>>, vector<32x256xbf16>
    %cst = arith.constant dense<0.000000e+00> : vector<32x256xf32>
    %2 = tpu.matmul %0, %1, %cst {dimension_numbers = #tpu.dot_dimension_numbers<[1], [0], [0], [1], [0, 0, 1, 1], [], []>} : vector<32x32xbf16>, vector<32x256xbf16>, vector<32x256xf32> -> vector<32x256xf32>
    %c0_3 = arith.constant 0 : index
    %c0_4 = arith.constant 0 : index
    %3 = vector.load %arg4[%c0_3, %c0_4] : memref<32x32xbf16, #tpu.memory_space<vmem>>, vector<32x32xbf16>
    %c0_5 = arith.constant 0 : index
    %c0_6 = arith.constant 0 : index
    %4 = vector.load %arg2[%c0_5, %c0_6] : memref<32x256xbf16, #tpu.memory_space<vmem>>, vector<32x256xbf16>
    %cst_7 = arith.constant dense<0.000000e+00> : vector<32x256xf32>
    %5 = tpu.matmul %3, %4, %cst_7 {dimension_numbers = #tpu.dot_dimension_numbers<[1], [0], [0], [1], [0, 0, 1, 1], [], []>} : vector<32x32xbf16>, vector<32x256xbf16>, vector<32x256xf32> -> vector<32x256xf32>
    %6 = arith.addf %2, %5 : vector<32x256xf32>
    %c0_8 = arith.constant 0 : index
    %c0_9 = arith.constant 0 : index
    %7 = vector.load %arg5[%c0_8, %c0_9] : memref<32x1xf32, #tpu.memory_space<vmem>>, vector<32x1xf32>
    %8 = vector.broadcast %7 : vector<32x1xf32> to vector<32x256xf32>
    %9 = arith.addf %6, %8 : vector<32x256xf32>
    %cst_10 = arith.constant 0.000000e+00 : f32
    %10 = vector.broadcast %cst_10 : f32 to vector<32x256xf32>
    %11 = arith.maximumf %9, %10 : vector<32x256xf32>
    %c0_11 = arith.constant 0 : index
    %c0_12 = arith.constant 0 : index
    %12 = vector.load %arg6[%c0_11, %c0_12] : memref<1x32xf32, #tpu.memory_space<vmem>>, vector<1x32xf32>
    %cst_13 = arith.constant dense<0.000000e+00> : vector<1x256xf32>
    %13 = tpu.matmul %12, %11, %cst_13 {dimension_numbers = #tpu.dot_dimension_numbers<[1], [0], [0], [1], [0, 0, 1, 1], [], []>} : vector<1x32xf32>, vector<32x256xf32>, vector<1x256xf32> -> vector<1x256xf32>
    %c0_14 = arith.constant 0 : index
    %c0_15 = arith.constant 0 : index
    %14 = vector.load %arg7[%c0_14, %c0_15] : memref<1x1xf32, #tpu.memory_space<vmem>>, vector<1x1xf32>
    %15 = vector.broadcast %14 : vector<1x1xf32> to vector<1x256xf32>
    %16 = arith.addf %13, %15 : vector<1x256xf32>
    %17 = math.absf %16 : vector<1x256xf32>
    %cst_16 = arith.constant 0.000000e+00 : f32
    %18 = vector.broadcast %cst_16 : f32 to vector<1x256xf32>
    %19 = arith.subf %18, %17 : vector<1x256xf32>
    %20 = math.exp %19 : vector<1x256xf32>
    %cst_17 = arith.constant 0.000000e+00 : f32
    %21 = vector.broadcast %cst_17 : f32 to vector<1x256xf32>
    %22 = arith.cmpf oge, %16, %21 : vector<1x256xf32>
    %cst_18 = arith.constant 1.000000e+00 : f32
    %23 = vector.broadcast %cst_18 : f32 to vector<1x256xf32>
    %24 = arith.select %22, %23, %20 : vector<1x256xi1>, vector<1x256xf32>
    %cst_19 = arith.constant 1.000000e+00 : f32
    %25 = vector.broadcast %cst_19 : f32 to vector<1x256xf32>
    %26 = arith.addf %25, %20 : vector<1x256xf32>
    %27 = tpu.reciprocal %26 {approx = true} : vector<1x256xf32> -> vector<1x256xf32>
    %28 = arith.mulf %24, %27 : vector<1x256xf32>
    %c0_20 = arith.constant 0 : index
    %c0_21 = arith.constant 0 : index
    %29 = vector.load %arg8[%c0_20, %c0_21] : memref<1x256xf32, #tpu.memory_space<vmem>>, vector<1x256xf32>
    tpu.vector_store %arg8[%c0_20, %c0_21], %28 {strides = array<i32>} : memref<1x256xf32, #tpu.memory_space<vmem>>, vector<1x256xf32>,
    return
  }
  func.func @transform_0(%arg0: i32) -> (i32, i32) {
    %c0_i32 = arith.constant 0 : i32
    %c0_i32_0 = arith.constant 0 : i32
    return %c0_i32, %arg0 : i32, i32
  }
  func.func @transform_1(%arg0: i32) -> (i32, i32) {
    %c0_i32 = arith.constant 0 : i32
    %c0_i32_0 = arith.constant 0 : i32
    return %c0_i32, %arg0 : i32, i32
  }
  func.func @transform_2(%arg0: i32) -> (i32, i32) {
    %c0_i32 = arith.constant 0 : i32
    %c0_i32_0 = arith.constant 0 : i32
    %c0_i32_1 = arith.constant 0 : i32
    return %c0_i32, %c0_i32_0 : i32, i32
  }
  func.func @transform_3(%arg0: i32) -> (i32, i32) {
    %c0_i32 = arith.constant 0 : i32
    %c0_i32_0 = arith.constant 0 : i32
    %c0_i32_1 = arith.constant 0 : i32
    return %c0_i32, %c0_i32_0 : i32, i32
  }
  func.func @transform_4(%arg0: i32) -> (i32, i32) {
    %c0_i32 = arith.constant 0 : i32
    %c0_i32_0 = arith.constant 0 : i32
    %c0_i32_1 = arith.constant 0 : i32
    return %c0_i32, %c0_i32_0 : i32, i32
  }
  func.func @transform_5(%arg0: i32) -> (i32, i32) {
    %c0_i32 = arith.constant 0 : i32
    %c0_i32_0 = arith.constant 0 : i32
    %c0_i32_1 = arith.constant 0 : i32
    return %c0_i32, %c0_i32_0 : i32, i32
  }
  func.func @transform_6(%arg0: i32) -> (i32, i32) {
    %c0_i32 = arith.constant 0 : i32
    %c0_i32_0 = arith.constant 0 : i32
    %c0_i32_1 = arith.constant 0 : i32
    return %c0_i32, %c0_i32_0 : i32, i32
  }
  func.func @transform_7(%arg0: i32) -> (i32, i32) {
    %c0_i32 = arith.constant 0 : i32
    %c0_i32_0 = arith.constant 0 : i32
    return %c0_i32, %arg0 : i32, i32
  }
}

</mosaic_0001>

<llo_original>
// kernel: tpu_custom_call.1
$region0: #{tpu_custom_call.1}
  #allocation0 [shape = 'u32[]', space=smem, size = 0x4, offset = 0x4, fixed_abs, tag = 'smem constant byte address 0x4 - core index']
  #allocation1 [shape = 'u32[72,128]{1,0:T(1,128)}', space=vmem, size = 0x9000, scoped, tag = 'internal scratch']
  #allocation2 [shape = 'f32[1,1]{1,0:T(1,128)S(1)}', space=vmem, size = 0x200, scoped, tag = 'scoped memory for tpu_custom_call.1']
  %s0 = inlined_call_operand.hbm [shape: bf16[32,512], index: 0, kind: input, shape index: {}]
  %s1 = inlined_call_operand.hbm [shape: bf16[32,512], index: 1, kind: input, shape index: {}]
  %s2 = inlined_call_operand.vmem [shape: bf16[32,32], index: 2, kind: input, shape index: {}]
  %s3 = inlined_call_operand.vmem [shape: bf16[32,32], index: 3, kind: input, shape index: {}]
  %s4 = inlined_call_operand.vmem [shape: f32[32,1], index: 4, kind: input, shape index: {}]
  %s5 = inlined_call_operand.vmem [shape: f32[1,32], index: 5, kind: input, shape index: {}]
  %s6 = inlined_call_operand.<no memory space> [shape: f32[1,1], index: 6, kind: input, shape index: {}]
  %s7 = inlined_call_operand.hbm [shape: f32[1,512], index: 7, kind: output, shape index: {}]
  %s8 = sld [smem:[#allocation0]]
  $region69: #{tpu_custom_call.1} parent=0
    _
  %s10 = ssub.s32 1, %s8
  %s11 = scalar_select 0, %s10, %s8
  %v12 = vstv %s6
  %13 = vst [vmem:[#allocation2] sm:$0x1] %v12
  $region1: #{tpu_custom_call.1} parent=0
    #allocation3 [shape = 'u8[32768]{0}', space=vmem, size = 0x8000, scoped, tag = 'input window, operand 0']
    #allocation4 [shape = 's32[2]{0}', space=sflag, size = 0x8, scoped, tag = 'scoped memory for tpu_custom_call.1']
    #allocation5 [shape = 's32[2]{0}', space=sflag, size = 0x8, scoped, tag = 'scoped memory for tpu_custom_call.1']
    #allocation6 [shape = 'u8[32768]{0}', space=vmem, size = 0x8000, scoped, tag = 'input window, operand 1']
    #allocation7 [shape = 's32[2]{0}', space=sflag, size = 0x8, scoped, tag = 'scoped memory for tpu_custom_call.1']
    #allocation8 [shape = 'u8[2048]{0}', space=vmem, size = 0x800, scoped, tag = 'output window, operand 0']
    %14 = vsyncpa [#allocation4], 0
    %s15 = scalar_lea.sflag [#allocation4], 1
    %16 = vsyncpa %s15, 0
    %17 = vsyncpa [#allocation7], 0
    %s18 = scalar_lea.sflag [#allocation7], 1
    %19 = vsyncpa %s18, 0
    %20 = vsyncpa [#allocation5], 0
    %s21 = scalar_lea.sflag [#allocation5], 1
    %22 = vsyncpa %s21, 0
    loop: start=0, step=1, limit=4
    $region2: #{tpu_custom_call.1} parent=1 // loop_pre_header
      _
    $region3: #{tpu_custom_call.1} parent=1 // loop_header
      %s24 = sphi 0, %s28
      %p25 = scmp.ge.s32.totalorder %s24, 4
      %s34 = sphi 0, %s36
      %s37 = sphi 0, %s34
      %s38 = sphi 0, %s37
      %s54 = sphi 0, %s38
      %s60 = sphi 0, %s62
      %s63 = sphi 0, %s60
      %s64 = sphi 0, %s63
      %s80 = sphi 0, %s64
      %s84 = sphi 0, %s84
      %s86 = sphi 0, %s84
      %s87 = sphi 0, %s86
      %s101 = sphi 0, %s87
      %s105 = sphi 0, %s105
      %s107 = sphi 0, %s105
      %s108 = sphi 0, %s107
      %s122 = sphi 0, %s108
      %s126 = sphi 0, %s126
      %s128 = sphi 0, %s126
      %s129 = sphi 0, %s128
      %s143 = sphi 0, %s129
      %s147 = sphi 0, %s147
      %s149 = sphi 0, %s147
      %s150 = sphi 0, %s149
      %s164 = sphi 0, %s150
      %s168 = sphi 0, %s168
      %s170 = sphi 0, %s168
      %s171 = sphi 0, %s170
      %s185 = sphi 0, %s171
      %s191 = sphi 0, %s193
      %s194 = sphi 0, %s191
      %s195 = sphi 0, %s194
      %s211 = sphi 0, %s195
    $region4: #{tpu_custom_call.1} parent=1 // loop_header_branch
      %27 = sbr.rel (%p25) target = $region8
    $region5: #{tpu_custom_call.1} parent=1 // loop_body
      %s29 = ssub.s32 %s24, 1
      %s30 = ssub.s32 %s24, 2
      %s31 = sadd.s32 %s24, 1
      %s32 = ssub.s32 %s24, %s31
      %p33 = scmp.eq.s32.totalorder %s32, 0
      %s35 = sadd.s32 %s34, 1
      %s36 = scalar_select %p33, %s34, %s35
      %p39 = pneg %p33
      %p40 = scmp.eq.s32.totalorder %s24, 1
      %p41 = por %p39, %p40
      %p42 = scmp.ne.s32.totalorder %s34, %s37
      %p43 = scmp.eq.s32.totalorder %s24, 0
      %p44 = por %p42, %p43
      %p45 = scmp.ne.s32.totalorder %s34, %s37
      %p46 = scmp.eq.s32.totalorder %s29, 1
      %p47 = por %p45, %p46
      %p48 = scmp.ne.s32.totalorder %s37, %s38
      %p49 = scmp.eq.s32.totalorder %s29, 0
      %p50 = por %p48, %p49
      %p51 = scmp.ne.s32.totalorder %s37, %s38
      %p52 = scmp.eq.s32.totalorder %s30, 1
      %p53 = por %p51, %p52
      %p55 = scmp.ne.s32.totalorder %s38, %s54
      %p56 = scmp.eq.s32.totalorder %s30, 0
      %p57 = por %p55, %p56
      %s58 = ssub.s32 %s24, %s31
      %p59 = scmp.eq.s32.totalorder %s58, 0
      %s61 = sadd.s32 %s60, 1
      %s62 = scalar_select %p59, %s60, %s61
      %p65 = pneg %p59
      %p66 = scmp.eq.s32.totalorder %s24, 1
      %p67 = por %p65, %p66
      %p68 = scmp.ne.s32.totalorder %s60, %s63
      %p69 = scmp.eq.s32.totalorder %s24, 0
      %p70 = por %p68, %p69
      %p71 = scmp.ne.s32.totalorder %s60, %s63
      %p72 = scmp.eq.s32.totalorder %s29, 1
      %p73 = por %p71, %p72
      %p74 = scmp.ne.s32.totalorder %s63, %s64
      %p75 = scmp.eq.s32.totalorder %s29, 0
      %p76 = por %p74, %p75
      %p77 = scmp.ne.s32.totalorder %s63, %s64
      %p78 = scmp.eq.s32.totalorder %s30, 1
      %p79 = por %p77, %p78
      %p81 = scmp.ne.s32.totalorder %s64, %s80
      %p82 = scmp.eq.s32.totalorder %s30, 0
      %p83 = por %p81, %p82
      %s85 = sadd.s32 %s84, 1
      %p88 = scmp.eq.s32.totalorder %s24, 1
      %p89 = scmp.ne.s32.totalorder %s84, %s86
      %p90 = scmp.eq.s32.totalorder %s24, 0
      %p91 = por %p89, %p90
      %p92 = scmp.ne.s32.totalorder %s84, %s86
      %p93 = scmp.eq.s32.totalorder %s29, 1
      %p94 = por %p92, %p93
      %p95 = scmp.ne.s32.totalorder %s86, %s87
      %p96 = scmp.eq.s32.totalorder %s29, 0
      %p97 = por %p95, %p96
      %p98 = scmp.ne.s32.totalorder %s86, %s87
      %p99 = scmp.eq.s32.totalorder %s30, 1
      %p100 = por %p98, %p99
      %p102 = scmp.ne.s32.totalorder %s87, %s101
      %p103 = scmp.eq.s32.totalorder %s30, 0
      %p104 = por %p102, %p103
      %s106 = sadd.s32 %s105, 1
      %p109 = scmp.eq.s32.totalorder %s24, 1
      %p110 = scmp.ne.s32.totalorder %s105, %s107
      %p111 = scmp.eq.s32.totalorder %s24, 0
      %p112 = por %p110, %p111
      %p113 = scmp.ne.s32.totalorder %s105, %s107
      %p114 = scmp.eq.s32.totalorder %s29, 1
      %p115 = por %p113, %p114
      %p116 = scmp.ne.s32.totalorder %s107, %s108
      %p117 = scmp.eq.s32.totalorder %s29, 0
      %p118 = por %p116, %p117
      %p119 = scmp.ne.s32.totalorder %s107, %s108
      %p120 = scmp.eq.s32.totalorder %s30, 1
      %p121 = por %p119, %p120
      %p123 = scmp.ne.s32.totalorder %s108, %s122
      %p124 = scmp.eq.s32.totalorder %s30, 0
      %p125 = por %p123, %p124
      %s127 = sadd.s32 %s126, 1
      %p130 = scmp.eq.s32.totalorder %s24, 1
      %p131 = scmp.ne.s32.totalorder %s126, %s128
      %p132 = scmp.eq.s32.totalorder %s24, 0
      %p133 = por %p131, %p132
      %p134 = scmp.ne.s32.totalorder %s126, %s128
      %p135 = scmp.eq.s32.totalorder %s29, 1
      %p136 = por %p134, %p135
      %p137 = scmp.ne.s32.totalorder %s128, %s129
      %p138 = scmp.eq.s32.totalorder %s29, 0
      %p139 = por %p137, %p138
      %p140 = scmp.ne.s32.totalorder %s128, %s129
      %p141 = scmp.eq.s32.totalorder %s30, 1
      %p142 = por %p140, %p141
      %p144 = scmp.ne.s32.totalorder %s129, %s143
      %p145 = scmp.eq.s32.totalorder %s30, 0
      %p146 = por %p144, %p145
      %s148 = sadd.s32 %s147, 1
      %p151 = scmp.eq.s32.totalorder %s24, 1
      %p152 = scmp.ne.s32.totalorder %s147, %s149
      %p153 = scmp.eq.s32.totalorder %s24, 0
      %p154 = por %p152, %p153
      %p155 = scmp.ne.s32.totalorder %s147, %s149
      %p156 = scmp.eq.s32.totalorder %s29, 1
      %p157 = por %p155, %p156
      %p158 = scmp.ne.s32.totalorder %s149, %s150
      %p159 = scmp.eq.s32.totalorder %s29, 0
      %p160 = por %p158, %p159
      %p161 = scmp.ne.s32.totalorder %s149, %s150
      %p162 = scmp.eq.s32.totalorder %s30, 1
      %p163 = por %p161, %p162
      %p165 = scmp.ne.s32.totalorder %s150, %s164
      %p166 = scmp.eq.s32.totalorder %s30, 0
      %p167 = por %p165, %p166
      %s169 = sadd.s32 %s168, 1
      %p172 = scmp.eq.s32.totalorder %s24, 1
      %p173 = scmp.ne.s32.totalorder %s168, %s170
      %p174 = scmp.eq.s32.totalorder %s24, 0
      %p175 = por %p173, %p174
      %p176 = scmp.ne.s32.totalorder %s168, %s170
      %p177 = scmp.eq.s32.totalorder %s29, 1
      %p178 = por %p176, %p177
      %p179 = scmp.ne.s32.totalorder %s170, %s171
      %p180 = scmp.eq.s32.totalorder %s29, 0
      %p181 = por %p179, %p180
      %p182 = scmp.ne.s32.totalorder %s170, %s171
      %p183 = scmp.eq.s32.totalorder %s30, 1
      %p184 = por %p182, %p183
      %p186 = scmp.ne.s32.totalorder %s171, %s185
      %p187 = scmp.eq.s32.totalorder %s30, 0
      %p188 = por %p186, %p187
      %s189 = ssub.s32 %s24, %s31
      %p190 = scmp.eq.s32.totalorder %s189, 0
      %s192 = sadd.s32 %s191, 1
      %s193 = scalar_select %p190, %s191, %s192
      %p196 = pneg %p190
      %p197 = scmp.eq.s32.totalorder %s24, 1
      %p198 = por %p196, %p197
      %p199 = scmp.ne.s32.totalorder %s191, %s194
      %p200 = scmp.eq.s32.totalorder %s24, 0
      %p201 = por %p199, %p200
      %p202 = scmp.ne.s32.totalorder %s191, %s194
      %p203 = scmp.eq.s32.totalorder %s29, 1
      %p204 = por %p202, %p203
      %p205 = scmp.ne.s32.totalorder %s194, %s195
      %p206 = scmp.eq.s32.totalorder %s29, 0
      %p207 = por %p205, %p206
      %p208 = scmp.ne.s32.totalorder %s194, %s195
      %p209 = scmp.eq.s32.totalorder %s30, 1
      %p210 = por %p208, %p209
      %p212 = scmp.ne.s32.totalorder %s195, %s211
      %p213 = scmp.eq.s32.totalorder %s30, 0
      %p214 = por %p212, %p213
      %p215 = scmp.le.s32.totalorder 1, %s24
      %p216 = scmp.lt.s32.totalorder %s24, 3
      %p217 = pnand %p215, %p216
      %p218 = pneg %p217
      // Predicated region
      $region9: #{tpu_custom_call.1} parent=5 // pred_check
        _
      $region10: #{tpu_custom_call.1} parent=5 // pred_check_branch
        %220 = sbr.rel (%p217) target = $region12
      $region11: #{tpu_custom_call.1} parent=5 // pred_region
        %s221 = ssub.s32 %s24, 1
        // Predicated region
        $region13: #{tpu_custom_call.1} parent=11 // pred_check
          %p222 = pneg %p97
        $region14: #{tpu_custom_call.1} parent=11 // pred_check_branch
          %224 = sbr.rel (%p222) target = $region16
        $region15: #{tpu_custom_call.1} parent=11 // pred_region
          _
        $region16: #{tpu_custom_call.1} parent=11 // pred_fallthru
          _
        // Predicated region
        $region17: #{tpu_custom_call.1} parent=11 // pred_check
          %p225 = pneg %p118
        $region18: #{tpu_custom_call.1} parent=11 // pred_check_branch
          %227 = sbr.rel (%p225) target = $region20
        $region19: #{tpu_custom_call.1} parent=11 // pred_region
          _
        $region20: #{tpu_custom_call.1} parent=11 // pred_fallthru
          _
        // Predicated region
        $region21: #{tpu_custom_call.1} parent=11 // pred_check
          %p228 = pneg %p139
        $region22: #{tpu_custom_call.1} parent=11 // pred_check_branch
          %230 = sbr.rel (%p228) target = $region24
        $region23: #{tpu_custom_call.1} parent=11 // pred_region
          _
        $region24: #{tpu_custom_call.1} parent=11 // pred_fallthru
          _
        // Predicated region
        $region25: #{tpu_custom_call.1} parent=11 // pred_check
          %p231 = pneg %p160
        $region26: #{tpu_custom_call.1} parent=11 // pred_check_branch
          %233 = sbr.rel (%p231) target = $region28
        $region27: #{tpu_custom_call.1} parent=11 // pred_region
          _
        $region28: #{tpu_custom_call.1} parent=11 // pred_fallthru
          _
        // Predicated region
        $region29: #{tpu_custom_call.1} parent=11 // pred_check
          %p234 = pneg %p181
        $region30: #{tpu_custom_call.1} parent=11 // pred_check_branch
          %236 = sbr.rel (%p234) target = $region32
        $region31: #{tpu_custom_call.1} parent=11 // pred_region
          _
        $region32: #{tpu_custom_call.1} parent=11 // pred_fallthru
          _
      $region12: #{tpu_custom_call.1} parent=5 // pred_fallthru
        _
      %p237 = scmp.lt.s32.totalorder %s24, 2
      // Predicated region
      $region33: #{tpu_custom_call.1} parent=5 // pred_check
        %p238 = pneg %p237
      $region34: #{tpu_custom_call.1} parent=5 // pred_check_branch
        %240 = sbr.rel (%p238) target = $region36
      $region35: #{tpu_custom_call.1} parent=5 // pred_region
        // Predicated region
        $region37: #{tpu_custom_call.1} parent=35 // pred_check
          %p241 = pneg %p44
        $region38: #{tpu_custom_call.1} parent=35 // pred_check_branch
          %243 = sbr.rel (%p241) target = $region40
        $region39: #{tpu_custom_call.1} parent=35 // pred_region
          %s244 = sand.u32 %s34, 1
          %s245 = scalar_lea.sflag [#allocation4], %s244
          %s246 = sand.u32 %s34, 1
          %s247 = smul.addr %s246, 32
          %s248 = scalar_lea.vmem [#allocation3], %s247
          %s249 = smul.u32 2, %s24
          %251 = vsyncadd %s245, 0
          %s252 = smul.addr %s249, 4
          %s253 = scalar_lea.hbm %s0, %s252
          %s254 = sshll.u32 %s253, 4
          %s255 = int_to_ptr.hbm [resolvable:$true] %s254
          %s256 = sshll.u32 %s248, 4
          %s257 = int_to_ptr.vmem [resolvable:$true] %s256
          %262 = dma.hbm_to_vmem [thread:$0]  %s255, 512, %s257, %s245, 256, 128, 8
        $region40: #{tpu_custom_call.1} parent=35 // pred_fallthru
          _
        // Predicated region
        $region41: #{tpu_custom_call.1} parent=35 // pred_check
          %p263 = pneg %p70
        $region42: #{tpu_custom_call.1} parent=35 // pred_check_branch
          %265 = sbr.rel (%p263) target = $region44
        $region43: #{tpu_custom_call.1} parent=35 // pred_region
          %s266 = sand.u32 %s60, 1
          %s267 = scalar_lea.sflag [#allocation7], %s266
          %s268 = sand.u32 %s60, 1
          %s269 = smul.addr %s268, 32
          %s270 = scalar_lea.vmem [#allocation6], %s269
          %s271 = smul.u32 2, %s24
          %273 = vsyncadd %s267, 0
          %s274 = smul.addr %s271, 4
          %s275 = scalar_lea.hbm %s1, %s274
          %s276 = sshll.u32 %s275, 4
          %s277 = int_to_ptr.hbm [resolvable:$true] %s276
          %s278 = sshll.u32 %s270, 4
          %s279 = int_to_ptr.vmem [resolvable:$true] %s278
          %284 = dma.hbm_to_vmem [thread:$0]  %s277, 512, %s279, %s267, 256, 128, 8
        $region44: #{tpu_custom_call.1} parent=35 // pred_fallthru
          _
      $region36: #{tpu_custom_call.1} parent=5 // pred_fallthru
        _
      %p285 = scmp.le.s32.totalorder 1, %s24
      %p286 = scmp.lt.s32.totalorder %s24, 3
      %p287 = pnand %p285, %p286
      %p288 = pneg %p287
      // Predicated region
      $region45: #{tpu_custom_call.1} parent=5 // pred_check
        _
      $region46: #{tpu_custom_call.1} parent=5 // pred_check_branch
        %290 = sbr.rel (%p287) target = $region48
      $region47: #{tpu_custom_call.1} parent=5 // pred_region
        %s291 = ssub.s32 %s24, 1
        %s292 = sand.u32 %s37, 1
        %s293 = scalar_lea.sflag [#allocation4], %s292
        %s294 = sand.u32 %s37, 1
        %s295 = smul.addr %s294, 32
        %s296 = scalar_lea.vmem [#allocation3], %s295
        // Predicated region
        $region49: #{tpu_custom_call.1} parent=47 // pred_check
          %p297 = pneg %p50
        $region50: #{tpu_custom_call.1} parent=47 // pred_check_branch
          %299 = sbr.rel (%p297) target = $region52
        $region51: #{tpu_custom_call.1} parent=47 // pred_region
          %301 = dma.done %s293, 512
        $region52: #{tpu_custom_call.1} parent=47 // pred_fallthru
          _
        %s302 = sand.u32 %s63, 1
        %s303 = scalar_lea.sflag [#allocation7], %s302
        %s304 = sand.u32 %s63, 1
        %s305 = smul.addr %s304, 32
        %s306 = scalar_lea.vmem [#allocation6], %s305
        // Predicated region
        $region53: #{tpu_custom_call.1} parent=47 // pred_check
          %p307 = pneg %p76
        $region54: #{tpu_custom_call.1} parent=47 // pred_check_branch
          %309 = sbr.rel (%p307) target = $region56
        $region55: #{tpu_custom_call.1} parent=47 // pred_region
          %311 = dma.done %s303, 512
        $region56: #{tpu_custom_call.1} parent=47 // pred_fallthru
          _
        %s312 = sand.u32 %s37, 1
        %s313 = scalar_lea.sflag [#allocation4], %s312
        %s314 = sand.u32 %s37, 1
        %s315 = smul.addr %s314, 32
        %s316 = scalar_lea.vmem [#allocation3], %s315
        %p317 = pneg %p50
        %p318 = pneg %p47
        %s319 = sand.u32 %s63, 1
        %s320 = scalar_lea.sflag [#allocation7], %s319
        %s321 = sand.u32 %s63, 1
        %s322 = smul.addr %s321, 32
        %s323 = scalar_lea.vmem [#allocation6], %s322
        %p324 = pneg %p76
        %p325 = pneg %p73
        %p326 = pneg %p97
        %p327 = pneg %p94
        %p328 = pneg %p118
        %p329 = pneg %p115
        %p330 = pneg %p139
        %p331 = pneg %p136
        %p332 = pneg %p160
        %p333 = pneg %p157
        %p334 = pneg %p181
        %p335 = pneg %p178
        %p336 = pneg %p207
        %p337 = pneg %p204
        %s338 = sand.u32 %s194, 1
        %s339 = scalar_lea.sflag [#allocation5], %s338
        %s340 = sand.u32 %s194, 1
        %s341 = smul.addr %s340, 2
        %s342 = scalar_lea.vmem [#allocation8], %s341
        %s343 = smul.u32 2, %s29
        %s344 = smul.u32 2, %s29
        %s345 = smul.u32 2, %s29
        %v347 = vld [vmem:[%s2] sm:$0xf]
        %v348 = vld [vmem:[%s2 + $0x4] sm:$0xf]
        %v349 = vld [vmem:[%s2 + $0x8] sm:$0xf]
        %v350 = vld [vmem:[%s2 + $0xc] sm:$0xf]
        %v351 = vld [vmem:[%s296] sm:$0xff]
        %v352 = vld [vmem:[%s296 + $0x8] sm:$0xff]
        %v353 = vld [vmem:[%s296 + $0x10] sm:$0xff]
        %v354 = vld [vmem:[%s296 + $0x18] sm:$0xff]
        %v355 = vld [vmem:[%s3] sm:$0xf]
        %v356 = vld [vmem:[%s3 + $0x4] sm:$0xf]
        %v357 = vld [vmem:[%s3 + $0x8] sm:$0xf]
        %v358 = vld [vmem:[%s3 + $0xc] sm:$0xf]
        %v359 = vld [vmem:[%s306] sm:$0xff]
        %v360 = vld [vmem:[%s306 + $0x8] sm:$0xff]
        %v361 = vld [vmem:[%s306 + $0x10] sm:$0xff]
        %v362 = vld [vmem:[%s306 + $0x18] sm:$0xff]
        %v367 = vunpack.c.l.b16 %v355
        %v368 = vunpack.c.l.b16 %v356
        %v369 = vunpack.c.l.b16 %v357
        %v370 = vunpack.c.l.b16 %v358
        %v371 = vpack.c.b16 %v368, %v367
        %v372 = vpack.c.b16 %v370, %v369
        %v377 = vunpack.c.l.b16 %v359
        %v378 = vunpack.c.h.b16 %v359
        %v379 = vunpack.c.l.b16 %v360
        %v380 = vunpack.c.h.b16 %v360
        %v381 = vunpack.c.l.b16 %v361
        %v382 = vunpack.c.h.b16 %v361
        %v383 = vunpack.c.l.b16 %v362
        %v384 = vunpack.c.h.b16 %v362
        %v385 = vpack.c.b16 %v379, %v377
        %v386 = vpack.c.b16 %v380, %v378
        %v387 = vpack.c.b16 %v383, %v381
        %v388 = vpack.c.b16 %v384, %v382
        %vm393 = vcmask 261120
        %v395 = vsel %vm393, %v371, 0
        %v398 = vsel %vm393, %v372, 0
        %400 = vmatpush.bf16.msra.mxu0 0
        %401 = vmatpush.bf16.msra.mxu0 0
        %402 = vmatpush.bf16.msra.mxu0 0
        %403 = vmatpush.bf16.msra.mxu0 0
        %404 = vmatpush.bf16.msra.mxu0 0
        %405 = vmatpush.bf16.msra.mxu0 0
        %406 = vmatpush.bf16.msra.mxu0 %v387
        %407 = vmatpush.bf16.msra.mxu0 %v385
        %408 = vmatmul.bf16.gmra.mxu0 %v395
        %v409 = vpop.f32.mrf.mxu0
        %v410 = vadd.f32 0.0, %v409
        %v411 = vpop.f32.mrf.mxu0
        %v412 = vadd.f32 0.0, %v411
        %413 = vmatmul.bf16.gmra.mxu0 %v398
        %v414 = vpop.f32.mrf.mxu0
        %v415 = vadd.f32 0.0, %v414
        %v416 = vpop.f32.mrf.mxu0
        %v417 = vadd.f32 0.0, %v416
        %418 = vdwg.mxu0
        %419 = vmatpush.bf16.msra.mxu0 0
        %420 = vmatpush.bf16.msra.mxu0 0
        %421 = vmatpush.bf16.msra.mxu0 0
        %422 = vmatpush.bf16.msra.mxu0 0
        %423 = vmatpush.bf16.msra.mxu0 0
        %424 = vmatpush.bf16.msra.mxu0 0
        %425 = vmatpush.bf16.msra.mxu0 %v388
        %426 = vmatpush.bf16.msra.mxu0 %v386
        %427 = vmatmul.bf16.gmra.mxu0 %v395
        %v428 = vpop.f32.mrf.mxu0
        %v429 = vadd.f32 0.0, %v428
        %v430 = vpop.f32.mrf.mxu0
        %v431 = vadd.f32 0.0, %v430
        %432 = vmatmul.bf16.gmra.mxu0 %v398
        %v433 = vpop.f32.mrf.mxu0
        %v434 = vadd.f32 0.0, %v433
        %v435 = vpop.f32.mrf.mxu0
        %v436 = vadd.f32 0.0, %v435
        %437 = vdwg.mxu0
        %v442 = vunpack.c.l.b16 %v347
        %v443 = vunpack.c.l.b16 %v348
        %v444 = vunpack.c.l.b16 %v349
        %v445 = vunpack.c.l.b16 %v350
        %v446 = vpack.c.b16 %v443, %v442
        %v447 = vpack.c.b16 %v445, %v444
        %v452 = vunpack.c.l.b16 %v351
        %v453 = vunpack.c.h.b16 %v351
        %v454 = vunpack.c.l.b16 %v352
        %v455 = vunpack.c.h.b16 %v352
        %v456 = vunpack.c.l.b16 %v353
        %v457 = vunpack.c.h.b16 %v353
        %v458 = vunpack.c.l.b16 %v354
        %v459 = vunpack.c.h.b16 %v354
        %v460 = vpack.c.b16 %v454, %v452
        %v461 = vpack.c.b16 %v455, %v453
        %v462 = vpack.c.b16 %v458, %v456
        %v463 = vpack.c.b16 %v459, %v457
        %v469 = vsel %vm393, %v446, 0
        %v472 = vsel %vm393, %v447, 0
        %474 = vmatpush.bf16.msra.mxu0 0
        %475 = vmatpush.bf16.msra.mxu0 0
        %476 = vmatpush.bf16.msra.mxu0 0
        %477 = vmatpush.bf16.msra.mxu0 0
        %478 = vmatpush.bf16.msra.mxu0 0
        %479 = vmatpush.bf16.msra.mxu0 0
        %480 = vmatpush.bf16.msra.mxu0 %v462
        %481 = vmatpush.bf16.msra.mxu0 %v460
        %482 = vmatmul.bf16.gmra.mxu0 %v469
        %v483 = vpop.f32.mrf.mxu0
        %v484 = vadd.f32 %v410, %v483
        %v485 = vpop.f32.mrf.mxu0
        %v486 = vadd.f32 %v412, %v485
        %487 = vmatmul.bf16.gmra.mxu0 %v472
        %v488 = vpop.f32.mrf.mxu0
        %v489 = vadd.f32 %v415, %v488
        %v490 = vpop.f32.mrf.mxu0
        %v491 = vadd.f32 %v417, %v490
        %492 = vdwg.mxu0
        %493 = vmatpush.bf16.msra.mxu0 0
        %494 = vmatpush.bf16.msra.mxu0 0
        %495 = vmatpush.bf16.msra.mxu0 0
        %496 = vmatpush.bf16.msra.mxu0 0
        %497 = vmatpush.bf16.msra.mxu0 0
        %498 = vmatpush.bf16.msra.mxu0 0
        %499 = vmatpush.bf16.msra.mxu0 %v463
        %500 = vmatpush.bf16.msra.mxu0 %v461
        %501 = vmatmul.bf16.gmra.mxu0 %v469
        %v502 = vpop.f32.mrf.mxu0
        %v503 = vadd.f32 %v429, %v502
        %v504 = vpop.f32.mrf.mxu0
        %v505 = vadd.f32 %v431, %v504
        %506 = vmatmul.bf16.gmra.mxu0 %v472
        %v507 = vpop.f32.mrf.mxu0
        %v508 = vadd.f32 %v434, %v507
        %v509 = vpop.f32.mrf.mxu0
        %v510 = vadd.f32 %v436, %v509
        %511 = vdwg.mxu0
        %v512 = vld [vmem:[%s4] sm:$0xff]
        %v513 = vld [vmem:[%s4 + $0x8] sm:$0xff]
        %v514 = vld [vmem:[%s4 + $0x10] sm:$0xff]
        %v515 = vld [vmem:[%s4 + $0x18] sm:$0xff]
        %517 = vset.pattern.permute.xlu0 0
        %518 = vperm.xlu0 %517, %v512
        %v519 = vpop.permute.xlu0 %518
        %522 = vset.pattern.permute.xlu0 0
        %523 = vperm.xlu0 %522, %v513
        %v524 = vpop.permute.xlu0 %523
        %527 = vset.pattern.permute.xlu0 0
        %528 = vperm.xlu0 %527, %v514
        %v529 = vpop.permute.xlu0 %528
        %532 = vset.pattern.permute.xlu0 0
        %533 = vperm.xlu0 %532, %v515
        %v534 = vpop.permute.xlu0 %533
        %v536 = vadd.f32 %v484, %v519
        %v537 = vadd.f32 %v503, %v519
        %v538 = vadd.f32 %v486, %v524
        %v539 = vadd.f32 %v505, %v524
        %v540 = vadd.f32 %v489, %v529
        %v541 = vadd.f32 %v508, %v529
        %v542 = vadd.f32 %v491, %v534
        %v543 = vadd.f32 %v510, %v534
        %v544 = vmax.f32 %v536, 0.0
        %v545 = vmax.f32 %v537, 0.0
        %v546 = vmax.f32 %v538, 0.0
        %v547 = vmax.f32 %v539, 0.0
        %v548 = vmax.f32 %v540, 0.0
        %v549 = vmax.f32 %v541, 0.0
        %v550 = vmax.f32 %v542, 0.0
        %v551 = vmax.f32 %v543, 0.0
        %v552 = vld [vmem:[%s5] sm:$0x1]
        %v553 = vld [vmem:[#allocation2] sm:$0x1]
        %555 = vset.pattern.permute.xlu0 0
        %556 = vperm.xlu0 %555, %v553
        %v557 = vpop.permute.xlu0 %556
        %v559 = vperm.slane %v557, 0
        %v561 = vsel %vm393, %v552, 0
        %563 = vmatpush.msra.mxu0 0.0
        %564 = vmatpush.msra.mxu0 0.0
        %565 = vmatpush.msra.mxu0 0.0
        %566 = vmatpush.msra.mxu0 0.0
        %567 = vmatpush.msra.mxu0 0.0
        %568 = vmatpush.msra.mxu0 0.0
        %569 = vmatpush.msra.mxu0 0.0
        %570 = vmatpush.msra.mxu0 0.0
        %571 = vmatpush.msra.mxu0 0.0
        %572 = vmatpush.msra.mxu0 0.0
        %573 = vmatpush.msra.mxu0 0.0
        %574 = vmatpush.msra.mxu0 0.0
        %575 = vmatpush.msra.mxu0 %v550
        %576 = vmatpush.msra.mxu0 %v548
        %577 = vmatpush.msra.mxu0 %v546
        %578 = vmatpush.msra.mxu0 %v544
        %579 = vmatmul.f32.gmra.mxu0 %v561
        %v580 = vpop.f32.mrf.mxu0
        %v581 = vadd.f32 %v559, %v580
        %582 = vdwg.mxu0
        %583 = vmatpush.msra.mxu0 0.0
        %584 = vmatpush.msra.mxu0 0.0
        %585 = vmatpush.msra.mxu0 0.0
        %586 = vmatpush.msra.mxu0 0.0
        %587 = vmatpush.msra.mxu0 0.0
        %588 = vmatpush.msra.mxu0 0.0
        %589 = vmatpush.msra.mxu0 0.0
        %590 = vmatpush.msra.mxu0 0.0
        %591 = vmatpush.msra.mxu0 0.0
        %592 = vmatpush.msra.mxu0 0.0
        %593 = vmatpush.msra.mxu0 0.0
        %594 = vmatpush.msra.mxu0 0.0
        %595 = vmatpush.msra.mxu0 %v551
        %596 = vmatpush.msra.mxu0 %v549
        %597 = vmatpush.msra.mxu0 %v547
        %598 = vmatpush.msra.mxu0 %v545
        %599 = vmatmul.f32.gmra.mxu0 %v561
        %v600 = vpop.f32.mrf.mxu0
        %v601 = vadd.f32 %v559, %v600
        %602 = vdwg.mxu0
        %v603 = vand.u32 2147483647, %v581
        %v604 = vand.u32 2147483647, %v601
        %v605 = vsub.f32 0.0, %v603
        %v606 = vsub.f32 0.0, %v604
        %v607 = vmul.f32 %v605, 1.442695
        %v608 = vpow.pop %v607
        %v609 = vmul.f32 %v606, 1.442695
        %v610 = vpow.pop %v609
        %vm611 = vcmp.ge.f32.partialorder %v581, 0.0
        %vm612 = vcmp.ge.f32.partialorder %v601, 0.0
        %v613 = vsel %vm611, 1.0, %v608
        %v614 = vsel %vm612, 1.0, %v610
        %v615 = vadd.f32 %v608, 1.0
        %v616 = vadd.f32 %v610, 1.0
        %v617 = vrcp.pop %v615
        %v618 = vrcp.pop %v616
        %v619 = vmul.f32 %v613, %v617
        %v620 = vmul.f32 %v614, %v618
        %v623 = vrot.slane %v620, 7
        %vm624 = vcmask 1040384
        %v625 = vsel %vm624, %v619, %v623
        %v627 = vlaneseq
        %vm628 = vcmp.ge.s32.totalorder %v627, 0
        %vm629 = vcmp.lt.s32.totalorder %v627, 256
        %vm630 = vmand %vm628, %vm629
        %631 = vst.msk [vmem:[%s342] sm:$0x3] %vm630, %v625
        %s632 = sand.u32 %s194, 1
        %s633 = scalar_lea.sflag [#allocation5], %s632
        %s634 = sand.u32 %s194, 1
        %s635 = smul.addr %s634, 2
        %s636 = scalar_lea.vmem [#allocation8], %s635
        // Predicated region
        $region57: #{tpu_custom_call.1} parent=47 // pred_check
          %p637 = pneg %p204
        $region58: #{tpu_custom_call.1} parent=47 // pred_check_branch
          %639 = sbr.rel (%p637) target = $region60
        $region59: #{tpu_custom_call.1} parent=47 // pred_region
          %s640 = smul.u32 2, %s29
          %642 = vsyncadd %s633, 0
          %s643 = scalar_lea.hbm %s7, %s640
          %s645 = sshll.u32 %s636, 4
          %s646 = int_to_ptr.vmem [resolvable:$true] %s645
          %s647 = sshll.u32 %s643, 4
          %s648 = int_to_ptr.hbm [resolvable:$true] %s647
          %650 = dma.vmem_to_hbm [thread:$0]  %s646, 32, %s648, %s633
        $region60: #{tpu_custom_call.1} parent=47 // pred_fallthru
          _
      $region48: #{tpu_custom_call.1} parent=5 // pred_fallthru
        _
      %p651 = scmp.le.s32.totalorder 2, %s24
      // Predicated region
      $region61: #{tpu_custom_call.1} parent=5 // pred_check
        %p652 = pneg %p651
      $region62: #{tpu_custom_call.1} parent=5 // pred_check_branch
        %654 = sbr.rel (%p652) target = $region64
      $region63: #{tpu_custom_call.1} parent=5 // pred_region
        %s655 = ssub.s32 %s24, 2
        // Predicated region
        $region65: #{tpu_custom_call.1} parent=63 // pred_check
          %p656 = pneg %p210
        $region66: #{tpu_custom_call.1} parent=63 // pred_check_branch
          %658 = sbr.rel (%p656) target = $region68
        $region67: #{tpu_custom_call.1} parent=63 // pred_region
          %s659 = sand.u32 %s195, 1
          %s660 = scalar_lea.sflag [#allocation5], %s659
          %s661 = sand.u32 %s195, 1
          %s662 = smul.addr %s661, 2
          %s663 = scalar_lea.vmem [#allocation8], %s662
          %665 = dma.done %s660, 32
        $region68: #{tpu_custom_call.1} parent=63 // pred_fallthru
          _
      $region64: #{tpu_custom_call.1} parent=5 // pred_fallthru
        _
    $region6: #{tpu_custom_call.1} parent=1 // loop_footer
      %s28 = sadd.s32 1, %s24
    $region7: #{tpu_custom_call.1} parent=1 // loop_footer_branch
      %23 = sbr.rel target = $region3
    $region8: #{tpu_custom_call.1} parent=1 // loop_exit
      _
    %666 = vsyncpa [#allocation4], 1
    %s667 = scalar_lea.sflag [#allocation4], 1
    %668 = vsyncpa %s667, 1
    %669 = vsyncpa [#allocation7], 1
    %s670 = scalar_lea.sflag [#allocation7], 1
    %671 = vsyncpa %s670, 1
    %672 = vsyncpa [#allocation5], 1
    %s673 = scalar_lea.sflag [#allocation5], 1
    %674 = vsyncpa %s673, 1

</llo_original>
